<compile_context>
chip_gen: v6e
topology: v6e:2x2x1
jax: 0.10.0
libtpu: 0.0.40
codegen_flags: <defaults>
</compile_context>

<pallas_src>
import functools

import jax
import jax.numpy as jnp
from jax.experimental import pallas as pl
from jax.experimental.pallas import tpu as pltpu


# ---------------------------------------------------------------------------
# Fast path: whole problem resident in VMEM, single pass over h.
# ---------------------------------------------------------------------------
def _readout_fused_kernel(h_ref, w_ref, o_ref, *, inv_n):
    h = h_ref[...]                                                    # (N, D)
    mean = jnp.sum(h, axis=0, keepdims=True) * inv_n                  # (1, D)
    t = jnp.tanh(jnp.dot(mean, w_ref[...],
                         preferred_element_type=jnp.float32))         # (1, D)
    logits = jnp.sum(h * t, axis=-1, keepdims=True)                   # (N, 1)
    scores = jax.nn.sigmoid(logits)
    o_ref[...] = jnp.sum(scores * h, axis=0, keepdims=True).astype(o_ref.dtype)


# ---------------------------------------------------------------------------
# Streamed path, pass 1: per-shard partial column sums of h.
# ---------------------------------------------------------------------------
def _colsum_kernel(n_ref, h_ref, psum_ref, *, tm, tiles_per_shard):
    s = pl.program_id(0)
    i = pl.program_id(1)

    @pl.when(i == 0)
    def _():
        psum_ref[...] = jnp.zeros_like(psum_ref)

    row0 = (s * tiles_per_shard + i) * tm
    rows = jax.lax.broadcasted_iota(jnp.int32, (tm, 1), 0) + row0
    h = jnp.where(rows < n_ref[0], h_ref[...], 0.0)                   # tail mask
    psum_ref[...] += jnp.sum(h, axis=0, keepdims=True)


# ---------------------------------------------------------------------------
# Streamed path, pass 2: per-shard partial sigmoid(h @ t)-gated row sums.
# ---------------------------------------------------------------------------
def _gated_sum_kernel(n_ref, h_ref, t_ref, psum_ref, *, tm, tiles_per_shard):
    s = pl.program_id(0)
    i = pl.program_id(1)

    @pl.when(i == 0)
    def _():
        psum_ref[...] = jnp.zeros_like(psum_ref)

    row0 = (s * tiles_per_shard + i) * tm
    rows = jax.lax.broadcasted_iota(jnp.int32, (tm, 1), 0) + row0
    h = jnp.where(rows < n_ref[0], h_ref[...], 0.0)                   # tail mask
    # Masked rows are zero, so sigmoid(0) * 0 contributes nothing.
    logits = jnp.sum(h * t_ref[...], axis=-1, keepdims=True)          # (tm, 1)
    scores = jax.nn.sigmoid(logits)
    # TODO(synk): on v7x this VPU multiply + reduce could be moved to the idle
    # MXU (scores^T @ h); kept on VPU/XLU since it remains under the HBM roofline.
    psum_ref[...] += jnp.sum(scores * h, axis=0, keepdims=True)


# ---------------------------------------------------------------------------
# Wrapper
# ---------------------------------------------------------------------------
def _round_up(x, m):
    return -(-x // m) * m


def _pick_tm(n, d, target_bytes=4 << 20):
    """Row-tile height: ~4 MiB of h per tile, multiple of 8 sublanes."""
    tm = max(8, ((target_bytes // (d * 4)) // 8) * 8)
    return max(8, min(tm, _round_up(n, 8)))


def readout_forward(h, weight, *, tm=None, fast_path_bytes=12 << 20):
    """h: [N, D] f32, weight: [D, D] f32 -> [1, D] f32 (torch `readout.forward`)."""
    n, d = h.shape
    assert weight.shape == (d, d)
    h = h.astype(jnp.float32)
    weight = weight.astype(jnp.float32)

    h_bytes = n * d * 4
    w_bytes = d * d * 4

    # ------------------ fast path: single fused kernel, h read once --------
    if h_bytes + w_bytes <= fast_path_bytes:
        vmem_limit = min(48 << 20, max(16 << 20, 2 * (h_bytes + w_bytes) + (4 << 20)))
        kernel = functools.partial(_readout_fused_kernel, inv_n=1.0 / n)
        return pl.pallas_call(
            kernel,
            out_shape=jax.ShapeDtypeStruct((1, d), jnp.float32),
            grid=(1,),
            in_specs=[
                pl.BlockSpec((n, d), lambda i: (0, 0)),
                pl.BlockSpec((d, d), lambda i: (0, 0)),
            ],
            out_specs=pl.BlockSpec((1, d), lambda i: (0, 0)),
            compiler_params=pltpu.CompilerParams(
                dimension_semantics=("arbitrary",),
                vmem_limit_bytes=vmem_limit),
            cost_estimate=pl.CostEstimate(
                flops=5 * n * d + 2 * d * d,
                transcendentals=n + d,
                bytes_accessed=h_bytes + w_bytes + d * 4),
        )(h, weight)

    # ------------------ streamed path: two passes over h -------------------
    if tm is None:
        tm = _pick_tm(n, d)
    tm = max(8, (tm // 8) * 8)

    num_tiles = -(-n // tm)
    num_shards = 2 if num_tiles >= 2 else 1            # v7x: one shard per TC
    tiles_per_shard = -(-num_tiles // num_shards)

    n_arr = jnp.array([n], jnp.int32)                  # scalar prefetch (SMEM)

    # h index map: clamp phantom tiles of the last shard into range; they are
    # fully masked in-kernel, so they contribute nothing.
    def h_index_map(s, i, n_ref):
        tile = s * tiles_per_shard + i
        return (jnp.minimum(tile, num_tiles - 1), 0)

    vmem_limit = min(48 << 20, max(16 << 20, 2 * tm * d * 4 + (4 << 20)))
    cparams = pltpu.CompilerParams(
        dimension_semantics=("parallel", "arbitrary"),
        vmem_limit_bytes=vmem_limit)

    # ---- pass 1: per-shard partial column sums of h ----
    colsum_partial = pl.pallas_call(
        functools.partial(_colsum_kernel, tm=tm, tiles_per_shard=tiles_per_shard),
        out_shape=jax.ShapeDtypeStruct((num_shards, d), jnp.float32),
        grid_spec=pltpu.PrefetchScalarGridSpec(
            num_scalar_prefetch=1,
            grid=(num_shards, tiles_per_shard),
            in_specs=[pl.BlockSpec((tm, d), h_index_map)],
            out_specs=pl.BlockSpec((1, d), lambda s, i, n_ref: (s, 0)),
        ),
        compiler_params=cparams,
        cost_estimate=pl.CostEstimate(
            flops=n * d, transcendentals=0,
            bytes_accessed=h_bytes + num_shards * d * 4),
    )(n_arr, h)

    # Tiny (1,D)@(D,D) matmul + tanh in XLA, between the two streaming passes
    # (keeps W out of the Pallas pipeline entirely).
    mean = jnp.sum(colsum_partial, axis=0, keepdims=True) * (1.0 / n)
    t = jnp.tanh(mean @ weight)                                        # (1, D)

    # ---- pass 2: per-shard partial sigmoid-gated row sums ----
    gated_partial = pl.pallas_call(
        functools.partial(_gated_sum_kernel, tm=tm, tiles_per_shard=tiles_per_shard),
        out_shape=jax.ShapeDtypeStruct((num_shards, d), jnp.float32),
        grid_spec=pltpu.PrefetchScalarGridSpec(
            num_scalar_prefetch=1,
            grid=(num_shards, tiles_per_shard),
            in_specs=[
                pl.BlockSpec((tm, d), h_index_map),
                pl.BlockSpec((1, d), lambda s, i, n_ref: (0, 0)),
            ],
            out_specs=pl.BlockSpec((1, d), lambda s, i, n_ref: (s, 0)),
        ),
        compiler_params=cparams,
        cost_estimate=pl.CostEstimate(
            flops=4 * n * d, transcendentals=n,
            bytes_accessed=h_bytes + d * 4 + num_shards * d * 4),
    )(n_arr, h, t)

    return jnp.sum(gated_partial, axis=0, keepdims=True)


if __name__ == "__main__":
    def ref(h, w):
        g = jnp.tanh(jnp.mean(h, axis=0) @ w)                   # (d,)
        s = jax.nn.sigmoid(h @ g)                                # (n,)
        return (s[:, None] * h).sum(axis=0, keepdims=True)      # (1, d)

    key = jax.random.PRNGKey(0)
    k1, k2, k3, k4 = jax.random.split(key, 4)

    # Case 1: small graph -> fused single-block fast path (h read once).
    n1, d1 = 8, 32
    h1 = jax.random.normal(k1, (n1, d1), jnp.float32)
    b1 = jnp.sqrt(6.0 / (d1 + d1))                               # xavier_uniform_
    w1 = jax.random.uniform(k2, (d1, d1), jnp.float32, -b1, b1)
    y1 = readout_forward(h1, w1)
    jax.block_until_ready(y1)
    assert y1.shape == (1, d1), y1.shape
    assert jnp.allclose(y1, ref(h1, w1), atol=1e-5, rtol=1e-5), float(
        jnp.max(jnp.abs(y1 - ref(h1, w1))))

    # Case 2: ragged N, forced streamed 2-pass path (multi-tile, 2 shards,
    # in-kernel tail masking + clamped phantom tile).
    n2, d2 = 300, 128
    h2 = jax.random.normal(k3, (n2, d2), jnp.float32)
    b2 = jnp.sqrt(6.0 / (d2 + d2))
    w2 = jax.random.uniform(k4, (d2, d2), jnp.float32, -b2, b2)
    y2 = readout_forward(h2, w2, tm=64, fast_path_bytes=0)
    jax.block_until_ready(y2)
    assert y2.shape == (1, d2), y2.shape
    assert jnp.allclose(y2, ref(h2, w2), atol=1e-4, rtol=1e-4), float(
        jnp.max(jnp.abs(y2 - ref(h2, w2))))

    print("KERNEL_OK")
</pallas_src>

<mosaic_0001>
module attributes {stable_mosaic.version = 11 : i64} {
  func.func @_readout_fused_kernel(%arg0: i32, %arg1: memref<8x32xf32, #tpu.memory_space<vmem>>, %arg2: memref<32x32xf32, #tpu.memory_space<vmem>>, %arg3: memref<1x32xf32, #tpu.memory_space<vmem>>) attributes {dimension_semantics = [#tpu.dimension_semantics<arbitrary>], iteration_bounds = array<i64: 1>, scalar_prefetch = 0 : i64, scratch_operands = 0 : i64, tpu.core_type = #tpu.core_type<tc>, window_params = [{pipeline_mode = #tpu.pipeline_mode<synchronous>, transform_indices = @transform_0, window_bounds = array<i64: 8, 32>}, {pipeline_mode = #tpu.pipeline_mode<synchronous>, transform_indices = @transform_1, window_bounds = array<i64: 32, 32>}, {pipeline_mode = #tpu.pipeline_mode<synchronous>, transform_indices = @transform_2, window_bounds = array<i64: 1, 32>}]} {
    %c0 = arith.constant 0 : index
    %c0_0 = arith.constant 0 : index
    %0 = vector.load %arg1[%c0, %c0_0] : memref<8x32xf32, #tpu.memory_space<vmem>>, vector<8x32xf32>
    %cst = arith.constant dense<0.000000e+00> : vector<32xf32>
    %1 = vector.multi_reduction <add>, %0, %cst [0] : vector<8x32xf32> to vector<32xf32>
    %2 = vector.shape_cast %1 : vector<32xf32> to vector<1x32xf32>
    %cst_1 = arith.constant 1.250000e-01 : f32
    %3 = vector.broadcast %cst_1 : f32 to vector<1x32xf32>
    %4 = arith.mulf %2, %3 : vector<1x32xf32>
    %c0_2 = arith.constant 0 : index
    %c0_3 = arith.constant 0 : index
    %5 = vector.load %arg2[%c0_2, %c0_3] : memref<32x32xf32, #tpu.memory_space<vmem>>, vector<32x32xf32>
    %cst_4 = arith.constant dense<0.000000e+00> : vector<1x32xf32>
    %6 = tpu.matmul %4, %5, %cst_4 {dimension_numbers = #tpu.dot_dimension_numbers<[1], [0], [0], [1], [0, 0, 1, 1], [], []>} : vector<1x32xf32>, vector<32x32xf32>, vector<1x32xf32> -> vector<1x32xf32>
    %7 = math.tanh %6 : vector<1x32xf32>
    %8 = vector.broadcast %7 : vector<1x32xf32> to vector<8x32xf32>
    %9 = arith.mulf %0, %8 : vector<8x32xf32>
    %cst_5 = arith.constant dense<0.000000e+00> : vector<8xf32>
    %10 = vector.multi_reduction <add>, %9, %cst_5 [1] : vector<8x32xf32> to vector<8xf32>
    %11 = vector.shape_cast %10 : vector<8xf32> to vector<8x1xf32>
    %12 = arith.negf %11 : vector<8x1xf32>
    %13 = math.exp %12 : vector<8x1xf32>
    %cst_6 = arith.constant 1.000000e+00 : f32
    %14 = vector.broadcast %cst_6 : f32 to vector<8x1xf32>
    %15 = arith.addf %14, %13 : vector<8x1xf32>
    %16 = arith.divf %14, %15 : vector<8x1xf32>
    %17 = vector.broadcast %16 : vector<8x1xf32> to vector<8x32xf32>
    %18 = arith.mulf %17, %0 : vector<8x32xf32>
    %cst_7 = arith.constant dense<0.000000e+00> : vector<32xf32>
    %19 = vector.multi_reduction <add>, %18, %cst_7 [0] : vector<8x32xf32> to vector<32xf32>
    %20 = vector.shape_cast %19 : vector<32xf32> to vector<1x32xf32>
    %c0_8 = arith.constant 0 : index
    %c0_9 = arith.constant 0 : index
    %21 = vector.load %arg3[%c0_8, %c0_9] : memref<1x32xf32, #tpu.memory_space<vmem>>, vector<1x32xf32>
    tpu.vector_store %arg3[%c0_8, %c0_9], %20 {strides = array<i32>} : memref<1x32xf32, #tpu.memory_space<vmem>>, vector<1x32xf32>,
    return
  }
  func.func @transform_0(%arg0: i32) -> (i32, i32) {
    %c0_i32 = arith.constant 0 : i32
    %c0_i32_0 = arith.constant 0 : i32
    %c0_i32_1 = arith.constant 0 : i32
    return %c0_i32, %c0_i32_0 : i32, i32
  }
  func.func @transform_1(%arg0: i32) -> (i32, i32) {
    %c0_i32 = arith.constant 0 : i32
    %c0_i32_0 = arith.constant 0 : i32
    %c0_i32_1 = arith.constant 0 : i32
    return %c0_i32, %c0_i32_0 : i32, i32
  }
  func.func @transform_2(%arg0: i32) -> (i32, i32) {
    %c0_i32 = arith.constant 0 : i32
    %c0_i32_0 = arith.constant 0 : i32
    %c0_i32_1 = arith.constant 0 : i32
    return %c0_i32, %c0_i32_0 : i32, i32
  }
}

</mosaic_0001>

<llo_original>
// kernel: tpu_custom_call.1
$region0: #{tpu_custom_call.1}
  #allocation0 [shape = 'u32[]', space=smem, size = 0x4, offset = 0x4, fixed_abs, tag = 'smem constant byte address 0x4 - core index']
  #allocation1 [shape = 'u32[144,128]{1,0:T(1,128)}', space=vmem, size = 0x12000, scoped, tag = 'internal scratch']
  %s0 = inlined_call_operand.hbm [shape: f32[8,32], index: 0, kind: input, shape index: {}]
  %s1 = inlined_call_operand.hbm [shape: f32[32,32], index: 1, kind: input, shape index: {}]
  %s2 = inlined_call_operand.hbm [shape: f32[1,32], index: 2, kind: output, shape index: {}]
  %s3 = sld [smem:[#allocation0]]
  $region26: #{tpu_custom_call.1} parent=0
    _
  %s5 = ssub.s32 1, %s3
  %s6 = scalar_select 0, %s5, %s3
  $region1: #{tpu_custom_call.1} parent=0
    #allocation2 [shape = 'u8[4096]{0}', space=vmem, size = 0x1000, scoped, tag = 'input window, operand 0, single buffered']
    #allocation3 [shape = 's32[1]{0}', space=sflag, size = 0x4, scoped, tag = 'scoped memory for tpu_custom_call.1']
    #allocation4 [shape = 's32[1]{0}', space=sflag, size = 0x4, scoped, tag = 'scoped memory for tpu_custom_call.1']
    #allocation5 [shape = 'u8[16384]{0}', space=vmem, size = 0x4000, scoped, tag = 'input window, operand 1, single buffered']
    #allocation6 [shape = 's32[1]{0}', space=sflag, size = 0x4, scoped, tag = 'scoped memory for tpu_custom_call.1']
    #allocation7 [shape = 'u8[512]{0}', space=vmem, size = 0x400, scoped, tag = 'output window, operand 0, single buffered']
    %7 = vsyncpa [#allocation3], 0
    %8 = vsyncpa [#allocation6], 0
    %9 = vsyncpa [#allocation4], 0
    // Predicated region
    $region2: #{tpu_custom_call.1} parent=1 // pred_check
      _
    $region3: #{tpu_custom_call.1} parent=1 // pred_check_branch
      %11 = sbr.rel (0) target = $region5
    $region4: #{tpu_custom_call.1} parent=1 // pred_region
      %s13 = ssub.s32 128, 128
      %14 = vsyncadd [#allocation3], %s13
      %s16 = sshll.u32 [#allocation2], 4
      %s17 = int_to_ptr.vmem [resolvable:$true] %s16
      %19 = dma.hbm_to_vmem [thread:$0]  %s0, 128, %s17, [#allocation3]
    $region5: #{tpu_custom_call.1} parent=1 // pred_fallthru
      _
    // Predicated region
    $region6: #{tpu_custom_call.1} parent=1 // pred_check
      _
    $region7: #{tpu_custom_call.1} parent=1 // pred_check_branch
      %21 = sbr.rel (0) target = $region9
    $region8: #{tpu_custom_call.1} parent=1 // pred_region
      %s23 = ssub.s32 512, 512
      %24 = vsyncadd [#allocation6], %s23
      %s25 = sshll.u32 [#allocation5], 4
      %s26 = int_to_ptr.vmem [resolvable:$true] %s25
      %31 = dma.hbm_to_vmem [thread:$0]  %s1, 512, %s26, [#allocation6], 128, 128, 8
    $region9: #{tpu_custom_call.1} parent=1 // pred_fallthru
      _
    // Predicated region
    $region10: #{tpu_custom_call.1} parent=1 // pred_check
      _
    $region11: #{tpu_custom_call.1} parent=1 // pred_check_branch
      %33 = sbr.rel (0) target = $region13
    $region12: #{tpu_custom_call.1} parent=1 // pred_region
      %34 = dma.done [#allocation3], 128
    $region13: #{tpu_custom_call.1} parent=1 // pred_fallthru
      _
    // Predicated region
    $region14: #{tpu_custom_call.1} parent=1 // pred_check
      _
    $region15: #{tpu_custom_call.1} parent=1 // pred_check_branch
      %36 = sbr.rel (0) target = $region17
    $region16: #{tpu_custom_call.1} parent=1 // pred_region
      %37 = dma.done [#allocation6], 512
    $region17: #{tpu_custom_call.1} parent=1 // pred_fallthru
      _
    %v38 = vld [vmem:[#allocation2] sm:$0xff]
    %vm39 = vcmask 261120
    %v40 = vsel %vm39, %v38, 0.0
    %v41 = vrot.slane %v40, 4
    %v42 = vadd.f32 %v40, %v41
    %v43 = vrot.slane %v42, 2
    %v44 = vadd.f32 %v42, %v43
    %v45 = vrot.slane %v44, 1
    %v46 = vadd.f32 %v44, %v45
    %v47 = vmul.f32 %v46, 0.125
    %v48 = vld [vmem:[#allocation5] sm:$0xff]
    %v49 = vld [vmem:[#allocation5 + $0x8] sm:$0xff]
    %v50 = vld [vmem:[#allocation5 + $0x10] sm:$0xff]
    %v51 = vld [vmem:[#allocation5 + $0x18] sm:$0xff]
    %v53 = vsel %vm39, %v47, 0
    %55 = vmatprep.subr.mxu0 0.0
    %56 = vmatpush1.msra.mxu0 0.0
    %57 = vmatprep.subr.mxu0 0.0
    %58 = vmatpush1.msra.mxu0 0.0
    %59 = vmatprep.subr.mxu0 0.0
    %60 = vmatpush1.msra.mxu0 0.0
    %61 = vmatprep.subr.mxu0 0.0
    %62 = vmatpush1.msra.mxu0 0.0
    %63 = vmatprep.subr.mxu0 0.0
    %64 = vmatpush1.msra.mxu0 0.0
    %65 = vmatprep.subr.mxu0 0.0
    %66 = vmatpush1.msra.mxu0 0.0
    %67 = vmatprep.subr.mxu0 0.0
    %68 = vmatpush1.msra.mxu0 0.0
    %69 = vmatprep.subr.mxu0 0.0
    %70 = vmatpush1.msra.mxu0 0.0
    %71 = vmatprep.subr.mxu0 0.0
    %72 = vmatpush1.msra.mxu0 0.0
    %73 = vmatprep.subr.mxu0 0.0
    %74 = vmatpush1.msra.mxu0 0.0
    %75 = vmatprep.subr.mxu0 0.0
    %76 = vmatpush1.msra.mxu0 0.0
    %77 = vmatprep.subr.mxu0 0.0
    %78 = vmatpush1.msra.mxu0 0.0
    %79 = vmatprep.subr.mxu0 0.0
    %80 = vmatpush1.msra.mxu0 %v51
    %81 = vmatprep.subr.mxu0 0.0
    %82 = vmatpush1.msra.mxu0 %v50
    %83 = vmatprep.subr.mxu0 0.0
    %84 = vmatpush1.msra.mxu0 %v49
    %85 = vmatprep.subr.mxu0 0.0
    %86 = vmatpush1.msra.mxu0 %v48
    %87 = vmatprep.subr.mxu0 0.0
    %88 = vmatpush2.msra.mxu0 0.0
    %89 = vmatprep.subr.mxu0 0.0
    %90 = vmatpush2.msra.mxu0 0.0
    %91 = vmatprep.subr.mxu0 0.0
    %92 = vmatpush2.msra.mxu0 0.0
    %93 = vmatprep.subr.mxu0 0.0
    %94 = vmatpush2.msra.mxu0 0.0
    %95 = vmatprep.subr.mxu0 0.0
    %96 = vmatpush2.msra.mxu0 0.0
    %97 = vmatprep.subr.mxu0 0.0
    %98 = vmatpush2.msra.mxu0 0.0
    %99 = vmatprep.subr.mxu0 0.0
    %100 = vmatpush2.msra.mxu0 0.0
    %101 = vmatprep.subr.mxu0 0.0
    %102 = vmatpush2.msra.mxu0 0.0
    %103 = vmatprep.subr.mxu0 0.0
    %104 = vmatpush2.msra.mxu0 0.0
    %105 = vmatprep.subr.mxu0 0.0
    %106 = vmatpush2.msra.mxu0 0.0
    %107 = vmatprep.subr.mxu0 0.0
    %108 = vmatpush2.msra.mxu0 0.0
    %109 = vmatprep.subr.mxu0 0.0
    %110 = vmatpush2.msra.mxu0 0.0
    %111 = vmatprep.subr.mxu0 0.0
    %112 = vmatpush2.msra.mxu0 0.0
    %113 = vmatprep.subr.mxu0 0.0
    %114 = vmatpush2.msra.mxu0 0.0
    %115 = vmatprep.subr.mxu0 0.0
    %116 = vmatpush2.msra.mxu0 0.0
    %117 = vmatprep.subr.mxu0 0.0
    %118 = vmatpush2.msra.mxu0 0.0
    %119 = vmatprep.mubr.f32.mxu0 0.0
    %120 = vmatmul.mubr.f32.gmra.mxu0 %v53
    %v121 = vpop.f32.mrf.mxu0
    %v122 = vadd.f32 0.0, %v121
    %v123 = vpop.f32.mrf.mxu0
    %124 = vdwg.mxu0
    %v125 = vtanh.pop %v122
    %v126 = vlaneseq
    %v127 = vshrl.u32 %v126, 7
    %v128 = vsub.s32 0, %v127
    %v129 = vrot.slane %v125, %v128
    %v130 = vmul.f32 %v38, %v129
    %v131 = vsel %vm39, %v130, 0.0
    %132 = vadd.xlane.f32.xlu0 %v131
    %v133 = vpop.xlane.xlu0 %132
    %v134 = vxor.u32 %v133, 2147483648
    %v135 = vmul.f32 %v134, 1.442695
    %v136 = vpow.pop %v135
    %v137 = vadd.f32 %v136, 1.0
    %v138 = vrcp.pop %v137
    %v139 = vmul.f32 1.0, %v138
    %v140 = vmul.f32 %v139, %v38
    %v141 = vsel %vm39, %v140, 0.0
    %v142 = vrot.slane %v141, 4
    %v143 = vadd.f32 %v141, %v142
    %v144 = vrot.slane %v143, 2
    %v145 = vadd.f32 %v143, %v144
    %v146 = vrot.slane %v145, 1
    %v147 = vadd.f32 %v145, %v146
    %vm148 = vcmask 253952
    %149 = vst.msk [vmem:[#allocation7] sm:$0x1] %vm148, %v147
    // Predicated region
    $region18: #{tpu_custom_call.1} parent=1 // pred_check
      _
    $region19: #{tpu_custom_call.1} parent=1 // pred_check_branch
      %151 = sbr.rel (0) target = $region21
    $region20: #{tpu_custom_call.1} parent=1 // pred_region
      %s153 = ssub.s32 16, 16
      %154 = vsyncadd [#allocation4], %s153
      %s156 = sshll.u32 [#allocation7], 4
      %s157 = int_to_ptr.vmem [resolvable:$true] %s156
      %159 = dma.vmem_to_hbm [thread:$0]  %s157, 16, %s2, [#allocation4]
    $region21: #{tpu_custom_call.1} parent=1 // pred_fallthru
      _
    // Predicated region
    $region22: #{tpu_custom_call.1} parent=1 // pred_check
      _
    $region23: #{tpu_custom_call.1} parent=1 // pred_check_branch
      %161 = sbr.rel (0) target = $region25
    $region24: #{tpu_custom_call.1} parent=1 // pred_region
      %162 = dma.done [#allocation4], 16
    $region25: #{tpu_custom_call.1} parent=1 // pred_fallthru
      _
    %163 = vsyncpa [#allocation3], 1
    %164 = vsyncpa [#allocation6], 1
    %165 = vsyncpa [#allocation4], 1

</llo_original>
